<compile_context>
chip_gen: v6e
topology: v6e:2x2x1
jax: 0.10.0
libtpu: 0.0.40
codegen_flags: <defaults>
</compile_context>

<pallas_src>
import functools

import jax
import jax.numpy as jnp
from jax import lax
from jax.experimental import pallas as pl
from jax.experimental.pallas import tpu as pltpu

_LANE = 128                 # vreg lane width
_SUB = 8                    # vreg sublane count (f32)
_ROW_ALIGN = 32             # keep all row counts 32-aligned so int8/bool masks tile natively
_TARGET_BLOCK_ROWS = 4096   # 4096 x 128 f32 = 2 MiB per input per pipeline buffer
_MIN_AUTO_BLOCK_ROWS = 512
_CHUNK_ROWS_CAP = 512       # fori_loop chunk: keeps d / d^2 temporaries <= 256 KiB


def _round_up(x, m):
    return ((x + m - 1) // m) * m


def _detect_num_cores():
    """TensorCores per device (2 on v7x-style megacore chips, else 1)."""
    try:
        dev = jax.devices()[0]
        for attr in ("num_cores", "core_count"):
            v = getattr(dev, attr, None)
            if isinstance(v, int) and v >= 1:
                return min(int(v), 2)
    except Exception:
        pass
    return 1


def _auto_block_rows(rows, num_cores):
    """Largest 32-aligned block <= target that divides rows evenly (avoids the ragged path)."""
    if rows <= _TARGET_BLOCK_ROWS:
        return rows
    for nc in dict.fromkeys((num_cores, 1)):
        br = _TARGET_BLOCK_ROWS
        while br >= _MIN_AUTO_BLOCK_ROWS:
            if rows % br == 0 and (rows // br) % nc == 0:
                return br
            br -= _ROW_ALIGN
    return _TARGET_BLOCK_ROWS          # ragged last block; kernel masks it


def _auto_chunk_rows(block_rows):
    """Largest 32-aligned divisor of block_rows that is <= the chunk cap."""
    if block_rows <= _CHUNK_ROWS_CAP:
        return block_rows
    cr = _CHUNK_ROWS_CAP
    while cr >= _ROW_ALIGN:
        if block_rows % cr == 0:
            return cr
        cr -= _ROW_ALIGN
    return _ROW_ALIGN                  # block_rows is always a multiple of 32


def _to_slab(flat, pad_value, rows):
    """Reshape a flat vector to a lane-dense (rows, 128) slab, padding at most once."""
    n = flat.shape[0]
    total = rows * _LANE
    if total > n:
        pad = jnp.full((total - n,), pad_value, dtype=flat.dtype)
        flat = jnp.concatenate([flat, pad], axis=0)
    return flat.reshape(rows, _LANE)


def _vreg_partial(x):
    """(chunk_rows, 128) -> (8, 128) via pure VPU vreg adds (tile-aligned reshape, no XLU)."""
    return jnp.sum(x.reshape(-1, _SUB, _LANE), axis=0)


def _silog_nomask_kernel(eps, block_rows, chunk_rows, blocks_per_core,
                         rows_total, need_row_mask,
                         p_ref, t_ref, s_ref, sq_ref):
    """Accumulate sum(d) and sum(d^2) into resident (8,128) partials (one per core)."""
    core = pl.program_id(0)
    i = pl.program_id(1)

    @pl.when(i == 0)
    def _():
        s_ref[...] = jnp.zeros_like(s_ref)
        sq_ref[...] = jnp.zeros_like(sq_ref)

    n_chunks = block_rows // chunk_rows

    def body(ci, carry):
        s_acc, sq_acc = carry
        r0 = pl.multiple_of(ci * chunk_rows, _SUB)
        p = jnp.maximum(p_ref[pl.ds(r0, chunk_rows), :].astype(jnp.float32), eps)
        t = jnp.maximum(t_ref[pl.ds(r0, chunk_rows), :].astype(jnp.float32), eps)
        d = jnp.log(p / t)                       # single EUP log per element
        if need_row_mask:                        # only the ragged-grid fallback pays this
            row = ((core * blocks_per_core + i) * block_rows + r0
                   + lax.broadcasted_iota(jnp.int32, (chunk_rows, _LANE), 0))
            d = jnp.where(row < rows_total, d, 0.0)
        return (s_acc + _vreg_partial(d), sq_acc + _vreg_partial(d * d))

    zero = jnp.zeros((_SUB, _LANE), jnp.float32)
    s_p, sq_p = lax.fori_loop(0, n_chunks, body, (zero, zero),
                              unroll=min(2, n_chunks))
    s_ref[...] += s_p
    sq_ref[...] += sq_p


def _silog_mask_kernel(eps, block_rows, chunk_rows, blocks_per_core,
                       rows_total, need_row_mask,
                       p_ref, t_ref, m_ref, s_ref, sq_ref, c_ref):
    """Masked variant; mask streamed in its native dtype, also accumulates the valid count."""
    core = pl.program_id(0)
    i = pl.program_id(1)

    @pl.when(i == 0)
    def _():
        s_ref[...] = jnp.zeros_like(s_ref)
        sq_ref[...] = jnp.zeros_like(sq_ref)
        c_ref[...] = jnp.zeros_like(c_ref)

    n_chunks = block_rows // chunk_rows

    def body(ci, carry):
        s_acc, sq_acc, c_acc = carry
        r0 = pl.multiple_of(ci * chunk_rows, _SUB)
        p = jnp.maximum(p_ref[pl.ds(r0, chunk_rows), :].astype(jnp.float32), eps)
        t = jnp.maximum(t_ref[pl.ds(r0, chunk_rows), :].astype(jnp.float32), eps)
        m_raw = m_ref[pl.ds(r0, chunk_rows), :]
        if m_raw.dtype == jnp.bool_:
            m = m_raw.astype(jnp.float32)
        else:
            m = (m_raw != 0).astype(jnp.float32)
        dlog = jnp.log(p / t)                    # single EUP log per element
        if need_row_mask:
            row = ((core * blocks_per_core + i) * block_rows + r0
                   + lax.broadcasted_iota(jnp.int32, (chunk_rows, _LANE), 0))
            valid = row < rows_total
            d = jnp.where(valid, dlog * m, 0.0)  # scrubs NaN/Inf from OOB rows
            m = jnp.where(valid, m, 0.0)
        else:
            d = dlog * m
        return (s_acc + _vreg_partial(d),
                sq_acc + _vreg_partial(d * d),
                c_acc + _vreg_partial(m))

    zero = jnp.zeros((_SUB, _LANE), jnp.float32)
    s_p, sq_p, c_p = lax.fori_loop(0, n_chunks, body, (zero, zero, zero),
                                   unroll=min(2, n_chunks))
    s_ref[...] += s_p
    sq_ref[...] += sq_p
    c_ref[...] += c_p


def silog_loss(prediction, target, mask=None, lambd=0.5, eps=1e-6,
               reduction="mean", block_rows=None, num_cores=None):
    """JAX/Pallas equivalent of SILogLoss.forward ('mean' and 'sum' give the same scalar)."""
    if reduction not in ("mean", "sum"):
        raise ValueError(f"Invalid reduction type: {reduction}. Must be 'mean' or 'sum'.")

    n = prediction.size
    if n == 0:
        return jnp.float32(0.0)

    if num_cores is None:
        num_cores = _detect_num_cores()
    num_cores = max(1, int(num_cores))

    rows = _round_up(pl.cdiv(n, _LANE), _ROW_ALIGN)
    p2 = _to_slab(prediction.reshape(-1), 1.0, rows)   # native dtype; cast in kernel
    t2 = _to_slab(target.reshape(-1), 1.0, rows)       # pad 1.0 -> log(1/1) = 0

    if block_rows is None:
        block_rows = _auto_block_rows(rows, num_cores)
    block_rows = min(rows, _round_up(int(block_rows), _ROW_ALIGN))
    chunk_rows = _auto_chunk_rows(block_rows)

    nblk = pl.cdiv(rows, block_rows)
    need_row_mask = (rows % block_rows) != 0
    if nblk % num_cores != 0:
        num_cores = 1   # TODO(synk): support uneven per-core block splits.
    blocks_per_core = nblk // num_cores

    grid = (num_cores, blocks_per_core)
    in_spec = pl.BlockSpec((block_rows, _LANE),
                           lambda c, i: (c * blocks_per_core + i, 0))
    out_spec = pl.BlockSpec((_SUB, _LANE), lambda c, i: (c, 0))
    acc_shape = jax.ShapeDtypeStruct((num_cores * _SUB, _LANE), jnp.float32)
    cparams = pltpu.CompilerParams(
        dimension_semantics=("parallel", "arbitrary"),
        vmem_limit_bytes=32 * 1024 * 1024)

    if mask is None:
        kern = functools.partial(_silog_nomask_kernel, eps, block_rows,
                                 chunk_rows, blocks_per_core, rows, need_row_mask)
        s_out, sq_out = pl.pallas_call(
            kern, out_shape=(acc_shape, acc_shape),
            grid_spec=pltpu.PrefetchScalarGridSpec(
                num_scalar_prefetch=0, grid=grid,
                in_specs=[in_spec, in_spec],
                out_specs=(out_spec, out_spec)),
            compiler_params=cparams,
        )(p2, t2)
        T = jnp.float32(n)          # count is analytic on the no-mask path
    else:
        if mask.size != n:
            # PyTorch handles [B, H, W] masks by unsqueezing the channel dim;
            # after flattening only the element count matters (C == 1).
            raise ValueError(
                f"Mask with {mask.size} elements incompatible with prediction "
                f"of {n} elements")
        m2 = _to_slab(mask.reshape(-1), 0, rows)   # native dtype, no wrapper cast pass
        kern = functools.partial(_silog_mask_kernel, eps, block_rows,
                                 chunk_rows, blocks_per_core, rows, need_row_mask)
        call = pl.pallas_call(
            kern, out_shape=(acc_shape, acc_shape, acc_shape),
            grid_spec=pltpu.PrefetchScalarGridSpec(
                num_scalar_prefetch=0, grid=grid,
                in_specs=[in_spec, in_spec, in_spec],
                out_specs=(out_spec, out_spec, out_spec)),
            compiler_params=cparams,
        )
        if m2.dtype == jnp.bool_:
            try:
                s_out, sq_out, c_out = call(p2, t2, m2)
            except Exception:
                # TODO(synk): drop this fallback once bool VMEM refs work everywhere.
                s_out, sq_out, c_out = call(p2, t2, m2.astype(jnp.int8))
        else:
            s_out, sq_out, c_out = call(p2, t2, m2)
        T = jnp.sum(c_out)

    s = jnp.sum(s_out)
    sq = jnp.sum(sq_out)
    T_safe = jnp.maximum(T, 1.0)
    loss = sq / T_safe - lambd * (s * s) / (T_safe * T_safe)
    # PyTorch returns 0.0 when there are no valid pixels.
    return jnp.where(T > 0.0, loss, jnp.float32(0.0))


def _silog_ref(prediction, target, mask=None, lambd=0.5, eps=1e-6):
    """Pure-JAX reference mirroring the PyTorch forward."""
    p = jnp.maximum(prediction.astype(jnp.float32), eps)
    t = jnp.maximum(target.astype(jnp.float32), eps)
    d = jnp.log(p) - jnp.log(t)
    if mask is not None:
        m = mask != 0
        d = jnp.where(m, d, 0.0)
        T = jnp.sum(m.astype(jnp.float32))
    else:
        T = jnp.float32(d.size)
    T_safe = jnp.maximum(T, 1.0)
    term1 = jnp.sum(d * d) / T_safe
    term2 = jnp.sum(d) ** 2 / (T_safe * T_safe)
    return jnp.where(T > 0.0, term1 - lambd * term2, 0.0)


def _check(name, got, want, rtol=1e-4, atol=1e-6):
    got = jax.block_until_ready(got)
    assert jnp.allclose(got, want, rtol=rtol, atol=atol), (name, got, want)


if __name__ == "__main__":
    key = jax.random.PRNGKey(0)
    k1, k2, k3 = jax.random.split(key, 3)

    B, C, H, W = 2, 1, 16, 16   # SILog operates on depth maps [B, 1, H, W]
    prediction = jax.random.uniform(k1, (B, C, H, W), jnp.float32, 0.1, 10.0)
    target = jax.random.uniform(k2, (B, C, H, W), jnp.float32, 0.1, 10.0)
    mask = jax.random.uniform(k3, (B, C, H, W), jnp.float32) > 0.3

    # 1) No-mask path (specialized 2-input kernel, analytic count).
    _check("nomask", silog_loss(prediction, target), _silog_ref(prediction, target))

    # 2) Masked path with a bool mask streamed in its native dtype.
    _check("mask_bool", silog_loss(prediction, target, mask),
           _silog_ref(prediction, target, mask))

    # 3) Odd spatial size: lane padding + 32-row alignment padding in one concat.
    kp, kt, km = jax.random.split(jax.random.PRNGKey(1), 3)
    p_odd = jax.random.uniform(kp, (2, 1, 17, 19), jnp.float32, 0.05, 5.0)
    t_odd = jax.random.uniform(kt, (2, 1, 17, 19), jnp.float32, 0.05, 5.0)
    m_odd = jax.random.uniform(km, (2, 1, 17, 19), jnp.float32) > 0.5
    _check("odd", silog_loss(p_odd, t_odd, m_odd), _silog_ref(p_odd, t_odd, m_odd))

    # 4) Multi-block grid + dual-core "parallel" split with resident accumulators.
    kp2, kt2 = jax.random.split(jax.random.PRNGKey(2), 2)
    p_big = jax.random.uniform(kp2, (2, 1, 128, 128), jnp.float32, 0.1, 10.0)
    t_big = jax.random.uniform(kt2, (2, 1, 128, 128), jnp.float32, 0.1, 10.0)
    _check("multiblock_2core",
           silog_loss(p_big, t_big, block_rows=32, num_cores=2),
           _silog_ref(p_big, t_big))

    # 5) Ragged last block (in-kernel row masking) with a numeric (float32) mask.
    kp3, kt3, km3 = jax.random.split(jax.random.PRNGKey(3), 3)
    p_rag = jax.random.uniform(kp3, (2, 1, 80, 80), jnp.float32, 0.1, 10.0)
    t_rag = jax.random.uniform(kt3, (2, 1, 80, 80), jnp.float32, 0.1, 10.0)
    m_rag = (jax.random.uniform(km3, (2, 1, 80, 80)) > 0.4).astype(jnp.float32)
    _check("ragged_mask",
           silog_loss(p_rag, t_rag, m_rag, block_rows=96),
           _silog_ref(p_rag, t_rag, m_rag))

    print("KERNEL_OK")
</pallas_src>

<mosaic_0001>
module attributes {stable_mosaic.version = 11 : i64} {
  func.func @_silog_nomask_kernel(%arg0: i32, %arg1: i32, %arg2: memref<32x128xf32, #tpu.memory_space<vmem>>, %arg3: memref<32x128xf32, #tpu.memory_space<vmem>>, %arg4: memref<8x128xf32, #tpu.memory_space<vmem>>, %arg5: memref<8x128xf32, #tpu.memory_space<vmem>>) attributes {dimension_semantics = [#tpu.dimension_semantics<parallel>, #tpu.dimension_semantics<arbitrary>], iteration_bounds = array<i64: 1, 1>, scalar_prefetch = 0 : i64, scratch_operands = 0 : i64, tpu.core_type = #tpu.core_type<tc>, window_params = [{transform_indices = @transform_0, window_bounds = array<i64: 32, 128>}, {transform_indices = @transform_1, window_bounds = array<i64: 32, 128>}, {transform_indices = @transform_2, window_bounds = array<i64: 8, 128>}, {transform_indices = @transform_3, window_bounds = array<i64: 8, 128>}]} {
    %c0_i32 = arith.constant 0 : i32
    %0 = arith.cmpi eq, %arg1, %c0_i32 : i32
    %1 = arith.extui %0 : i1 to i32
    %c0_i32_0 = arith.constant 0 : i32
    %2 = arith.cmpi ne, %1, %c0_i32_0 : i32
    scf.if %2 {
      %cst_15 = arith.constant 0.000000e+00 : f32
      %29 = vector.broadcast %cst_15 : f32 to vector<8x128xf32>
      %c0_16 = arith.constant 0 : index
      %c0_17 = arith.constant 0 : index
      %30 = vector.load %arg4[%c0_16, %c0_17] : memref<8x128xf32, #tpu.memory_space<vmem>>, vector<8x128xf32>
      tpu.vector_store %arg4[%c0_16, %c0_17], %29 {strides = array<i32>} : memref<8x128xf32, #tpu.memory_space<vmem>>, vector<8x128xf32>,
      %cst_18 = arith.constant 0.000000e+00 : f32
      %31 = vector.broadcast %cst_18 : f32 to vector<8x128xf32>
      %c0_19 = arith.constant 0 : index
      %c0_20 = arith.constant 0 : index
      %32 = vector.load %arg5[%c0_19, %c0_20] : memref<8x128xf32, #tpu.memory_space<vmem>>, vector<8x128xf32>
      tpu.vector_store %arg5[%c0_19, %c0_20], %31 {strides = array<i32>} : memref<8x128xf32, #tpu.memory_space<vmem>>, vector<8x128xf32>,
    } else {
    }
    %cst = arith.constant 0.000000e+00 : f32
    %3 = vector.broadcast %cst : f32 to vector<8x128xf32>
    %c0_i32_1 = arith.constant 0 : i32
    %c32_i32 = arith.constant 32 : i32
    %4 = arith.muli %c0_i32_1, %c32_i32 : i32
    %5 = tpu.assume_multiple %4, 8 : i32
    %6 = arith.index_cast %5 : i32 to index
    %c0 = arith.constant 0 : index
    %7 = vector.load %arg2[%6, %c0] : memref<32x128xf32, #tpu.memory_space<vmem>>, vector<32x128xf32>
    %cst_2 = arith.constant 9.99999997E-7 : f32
    %8 = vector.broadcast %cst_2 : f32 to vector<32x128xf32>
    %9 = arith.maximumf %7, %8 : vector<32x128xf32>
    %10 = arith.index_cast %5 : i32 to index
    %c0_3 = arith.constant 0 : index
    %11 = vector.load %arg3[%10, %c0_3] : memref<32x128xf32, #tpu.memory_space<vmem>>, vector<32x128xf32>
    %cst_4 = arith.constant 9.99999997E-7 : f32
    %12 = vector.broadcast %cst_4 : f32 to vector<32x128xf32>
    %13 = arith.maximumf %11, %12 : vector<32x128xf32>
    %14 = arith.divf %9, %13 : vector<32x128xf32>
    %15 = math.log %14 : vector<32x128xf32>
    %16 = vector.shape_cast %15 : vector<32x128xf32> to vector<4x8x128xf32>
    %cst_5 = arith.constant dense<0.000000e+00> : vector<8x128xf32>
    %17 = vector.multi_reduction <add>, %16, %cst_5 [0] : vector<4x8x128xf32> to vector<8x128xf32>
    %18 = arith.addf %3, %17 : vector<8x128xf32>
    %19 = arith.mulf %15, %15 : vector<32x128xf32>
    %20 = vector.shape_cast %19 : vector<32x128xf32> to vector<4x8x128xf32>
    %cst_6 = arith.constant dense<0.000000e+00> : vector<8x128xf32>
    %21 = vector.multi_reduction <add>, %20, %cst_6 [0] : vector<4x8x128xf32> to vector<8x128xf32>
    %22 = arith.addf %3, %21 : vector<8x128xf32>
    %c1_i32 = arith.constant 1 : i32
    %c0_7 = arith.constant 0 : index
    %c0_8 = arith.constant 0 : index
    %23 = vector.load %arg4[%c0_7, %c0_8] : memref<8x128xf32, #tpu.memory_space<vmem>>, vector<8x128xf32>
    %24 = arith.addf %23, %18 : vector<8x128xf32>
    %c0_9 = arith.constant 0 : index
    %c0_10 = arith.constant 0 : index
    %25 = vector.load %arg4[%c0_9, %c0_10] : memref<8x128xf32, #tpu.memory_space<vmem>>, vector<8x128xf32>
    tpu.vector_store %arg4[%c0_9, %c0_10], %24 {strides = array<i32>} : memref<8x128xf32, #tpu.memory_space<vmem>>, vector<8x128xf32>,
    %c0_11 = arith.constant 0 : index
    %c0_12 = arith.constant 0 : index
    %26 = vector.load %arg5[%c0_11, %c0_12] : memref<8x128xf32, #tpu.memory_space<vmem>>, vector<8x128xf32>
    %27 = arith.addf %26, %22 : vector<8x128xf32>
    %c0_13 = arith.constant 0 : index
    %c0_14 = arith.constant 0 : index
    %28 = vector.load %arg5[%c0_13, %c0_14] : memref<8x128xf32, #tpu.memory_space<vmem>>, vector<8x128xf32>
    tpu.vector_store %arg5[%c0_13, %c0_14], %27 {strides = array<i32>} : memref<8x128xf32, #tpu.memory_space<vmem>>, vector<8x128xf32>,
    return
  }
  func.func @transform_0(%arg0: i32, %arg1: i32) -> (i32, i32) {
    %c1_i32 = arith.constant 1 : i32
    %0 = arith.muli %arg0, %c1_i32 : i32
    %1 = arith.addi %0, %arg1 : i32
    %c0_i32 = arith.constant 0 : i32
    %c0_i32_0 = arith.constant 0 : i32
    return %1, %c0_i32 : i32, i32
  }
  func.func @transform_1(%arg0: i32, %arg1: i32) -> (i32, i32) {
    %c1_i32 = arith.constant 1 : i32
    %0 = arith.muli %arg0, %c1_i32 : i32
    %1 = arith.addi %0, %arg1 : i32
    %c0_i32 = arith.constant 0 : i32
    %c0_i32_0 = arith.constant 0 : i32
    return %1, %c0_i32 : i32, i32
  }
  func.func @transform_2(%arg0: i32, %arg1: i32) -> (i32, i32) {
    %c0_i32 = arith.constant 0 : i32
    %c0_i32_0 = arith.constant 0 : i32
    return %arg0, %c0_i32 : i32, i32
  }
  func.func @transform_3(%arg0: i32, %arg1: i32) -> (i32, i32) {
    %c0_i32 = arith.constant 0 : i32
    %c0_i32_0 = arith.constant 0 : i32
    return %arg0, %c0_i32 : i32, i32
  }
}

</mosaic_0001>

<llo_original>
// kernel: tpu_custom_call.1
$region0: #{tpu_custom_call.1}
  #allocation0 [shape = 'u32[]', space=smem, size = 0x4, offset = 0x4, fixed_abs, tag = 'smem constant byte address 0x4 - core index']
  #allocation1 [shape = 'u32[144,128]{1,0:T(1,128)}', space=vmem, size = 0x12000, scoped, tag = 'internal scratch']
  %s0 = inlined_call_operand.hbm [shape: f32[32,128], index: 0, kind: input, shape index: {}]
  %s1 = inlined_call_operand.hbm [shape: f32[32,128], index: 1, kind: input, shape index: {}]
  %s2 = inlined_call_operand.hbm [shape: f32[8,128], index: 2, kind: output, shape index: {0}]
  %s3 = inlined_call_operand.hbm [shape: f32[8,128], index: 3, kind: output, shape index: {1}]
  %4 = xla_tuple %s2, %s3
  %s5 = sld [smem:[#allocation0]]
  $region38: #{tpu_custom_call.1} parent=0
    _
  %s7 = ssub.s32 1, %s5
  %s8 = scalar_select 0, %s7, %s5
  $region1: #{tpu_custom_call.1} parent=0
    #allocation2 [shape = 'u8[16384]{0}', space=vmem, size = 0x4000, scoped, tag = 'input window, operand 0, single buffered']
    #allocation3 [shape = 's32[1]{0}', space=sflag, size = 0x4, scoped, tag = 'scoped memory for tpu_custom_call.1']
    #allocation4 [shape = 's32[1]{0}', space=sflag, size = 0x4, scoped, tag = 'scoped memory for tpu_custom_call.1']
    #allocation5 [shape = 'u8[16384]{0}', space=vmem, size = 0x4000, scoped, tag = 'input window, operand 1, single buffered']
    #allocation6 [shape = 's32[1]{0}', space=sflag, size = 0x4, scoped, tag = 'scoped memory for tpu_custom_call.1']
    #allocation7 [shape = 'u8[4096]{0}', space=vmem, size = 0x1000, scoped, tag = 'output window, operand 0, single buffered']
    #allocation8 [shape = 'u8[4096]{0}', space=vmem, size = 0x1000, scoped, tag = 'output window, operand 1, single buffered']
    #allocation9 [shape = 's32[1]{0}', space=sflag, size = 0x4, scoped, tag = 'scoped memory for tpu_custom_call.1']
    %9 = vsyncpa [#allocation3], 0
    %10 = vsyncpa [#allocation6], 0
    %11 = vsyncpa [#allocation4], 0
    %12 = vsyncpa [#allocation9], 0
    // Predicated region
    $region2: #{tpu_custom_call.1} parent=1 // pred_check
      _
    $region3: #{tpu_custom_call.1} parent=1 // pred_check_branch
      %14 = sbr.rel (0) target = $region5
    $region4: #{tpu_custom_call.1} parent=1 // pred_region
      %s15 = sadd.s32 0, 0
      %s16 = smul.u32 4, %s15
      %s18 = ssub.s32 512, 512
      %19 = vsyncadd [#allocation3], %s18
      %s20 = smul.addr %s16, 128
      %s21 = scalar_lea.hbm %s0, %s20
      %s22 = sshll.u32 [#allocation2], 4
      %s23 = int_to_ptr.vmem [resolvable:$true] %s22
      %28 = dma.hbm_to_vmem [thread:$0]  %s21, 512, %s23, [#allocation3], 128, 128, 8
    $region5: #{tpu_custom_call.1} parent=1 // pred_fallthru
      _
    // Predicated region
    $region6: #{tpu_custom_call.1} parent=1 // pred_check
      _
    $region7: #{tpu_custom_call.1} parent=1 // pred_check_branch
      %30 = sbr.rel (0) target = $region9
    $region8: #{tpu_custom_call.1} parent=1 // pred_region
      %s31 = sadd.s32 0, 0
      %s32 = smul.u32 4, %s31
      %s34 = ssub.s32 512, 512
      %35 = vsyncadd [#allocation6], %s34
      %s36 = smul.addr %s32, 128
      %s37 = scalar_lea.hbm %s1, %s36
      %s38 = sshll.u32 [#allocation5], 4
      %s39 = int_to_ptr.vmem [resolvable:$true] %s38
      %44 = dma.hbm_to_vmem [thread:$0]  %s37, 512, %s39, [#allocation6], 128, 128, 8
    $region9: #{tpu_custom_call.1} parent=1 // pred_fallthru
      _
    // Predicated region
    $region10: #{tpu_custom_call.1} parent=1 // pred_check
      _
    $region11: #{tpu_custom_call.1} parent=1 // pred_check_branch
      %46 = sbr.rel (0) target = $region13
    $region12: #{tpu_custom_call.1} parent=1 // pred_region
      %47 = dma.done [#allocation3], 512
    $region13: #{tpu_custom_call.1} parent=1 // pred_fallthru
      _
    // Predicated region
    $region14: #{tpu_custom_call.1} parent=1 // pred_check
      _
    $region15: #{tpu_custom_call.1} parent=1 // pred_check_branch
      %49 = sbr.rel (0) target = $region17
    $region16: #{tpu_custom_call.1} parent=1 // pred_region
      %50 = dma.done [#allocation6], 512
    $region17: #{tpu_custom_call.1} parent=1 // pred_fallthru
      _
    %s51 = sadd.s32 0, 0
    %s52 = smul.u32 4, %s51
    %s53 = sadd.s32 0, 0
    %s54 = smul.u32 4, %s53
    %p55 = scmp.eq.s32.totalorder 0, 0
    // Predicated region
    $region18: #{tpu_custom_call.1} parent=1 // pred_check
      %p56 = pneg %p55
    $region19: #{tpu_custom_call.1} parent=1 // pred_check_branch
      %58 = sbr.rel (%p56) target = $region21
    $region20: #{tpu_custom_call.1} parent=1 // pred_region
      %59 = vst [vmem:[#allocation7] sm:$0xff] 0.0
      %60 = vst [vmem:[#allocation8] sm:$0xff] 0.0
    $region21: #{tpu_custom_call.1} parent=1 // pred_fallthru
      _
    %v61 = vld [vmem:[#allocation2] sm:$0xff]
    %v62 = vld [vmem:[#allocation2 + $0x8] sm:$0xff]
    %v63 = vld [vmem:[#allocation2 + $0x10] sm:$0xff]
    %v64 = vld [vmem:[#allocation2 + $0x18] sm:$0xff]
    %v65 = vmax.f32 %v61, 1e-06
    %v66 = vmax.f32 %v62, 1e-06
    %v67 = vmax.f32 %v63, 1e-06
    %v68 = vmax.f32 %v64, 1e-06
    %v69 = vld [vmem:[#allocation5] sm:$0xff]
    %v70 = vld [vmem:[#allocation5 + $0x8] sm:$0xff]
    %v71 = vld [vmem:[#allocation5 + $0x10] sm:$0xff]
    %v72 = vld [vmem:[#allocation5 + $0x18] sm:$0xff]
    %v73 = vmax.f32 %v69, 1e-06
    %v74 = vmax.f32 %v70, 1e-06
    %v75 = vmax.f32 %v71, 1e-06
    %v76 = vmax.f32 %v72, 1e-06
    %v77 = vrcp.pop %v73
    %v78 = vmul.f32 %v65, %v77
    %v79 = vrcp.pop %v74
    %v80 = vmul.f32 %v66, %v79
    %v81 = vrcp.pop %v75
    %v82 = vmul.f32 %v67, %v81
    %v83 = vrcp.pop %v76
    %v84 = vmul.f32 %v68, %v83
    %v85 = vlog2.pop %v78
    %v86 = vmul.f32 %v85, 0.6931472
    %v87 = vlog2.pop %v80
    %v88 = vmul.f32 %v87, 0.6931472
    %v89 = vlog2.pop %v82
    %v90 = vmul.f32 %v89, 0.6931472
    %v91 = vlog2.pop %v84
    %v92 = vmul.f32 %v91, 0.6931472
    %v93 = vadd.f32 %v86, %v88
    %v94 = vadd.f32 %v93, %v90
    %v95 = vadd.f32 %v94, %v92
    %v96 = vadd.f32 %v95, 0.0
    %v97 = vmul.f32 %v86, %v86
    %v98 = vmul.f32 %v88, %v88
    %v99 = vmul.f32 %v90, %v90
    %v100 = vmul.f32 %v92, %v92
    %v101 = vadd.f32 %v97, %v98
    %v102 = vadd.f32 %v101, %v99
    %v103 = vadd.f32 %v102, %v100
    %v104 = vadd.f32 %v103, 0.0
    %v105 = vld [vmem:[#allocation7] sm:$0xff]
    %v106 = vadd.f32 %v105, %v96
    %107 = vst [vmem:[#allocation7] sm:$0xff] %v106
    %v108 = vld [vmem:[#allocation8] sm:$0xff]
    %v109 = vadd.f32 %v108, %v104
    %110 = vst [vmem:[#allocation8] sm:$0xff] %v109
    // Predicated region
    $region22: #{tpu_custom_call.1} parent=1 // pred_check
      _
    $region23: #{tpu_custom_call.1} parent=1 // pred_check_branch
      %112 = sbr.rel (0) target = $region25
    $region24: #{tpu_custom_call.1} parent=1 // pred_region
      %s114 = ssub.s32 128, 128
      %115 = vsyncadd [#allocation4], %s114
      %s117 = sshll.u32 [#allocation7], 4
      %s118 = int_to_ptr.vmem [resolvable:$true] %s117
      %120 = dma.vmem_to_hbm [thread:$0]  %s118, 128, %s2, [#allocation4]
    $region25: #{tpu_custom_call.1} parent=1 // pred_fallthru
      _
    // Predicated region
    $region26: #{tpu_custom_call.1} parent=1 // pred_check
      _
    $region27: #{tpu_custom_call.1} parent=1 // pred_check_branch
      %122 = sbr.rel (0) target = $region29
    $region28: #{tpu_custom_call.1} parent=1 // pred_region
      %s124 = ssub.s32 128, 128
      %125 = vsyncadd [#allocation9], %s124
      %s127 = sshll.u32 [#allocation8], 4
      %s128 = int_to_ptr.vmem [resolvable:$true] %s127
      %130 = dma.vmem_to_hbm [thread:$0]  %s128, 128, %s3, [#allocation9]
    $region29: #{tpu_custom_call.1} parent=1 // pred_fallthru
      _
    // Predicated region
    $region30: #{tpu_custom_call.1} parent=1 // pred_check
      _
    $region31: #{tpu_custom_call.1} parent=1 // pred_check_branch
      %132 = sbr.rel (0) target = $region33
    $region32: #{tpu_custom_call.1} parent=1 // pred_region
      %133 = dma.done [#allocation4], 128
    $region33: #{tpu_custom_call.1} parent=1 // pred_fallthru
      _
    // Predicated region
    $region34: #{tpu_custom_call.1} parent=1 // pred_check
      _
    $region35: #{tpu_custom_call.1} parent=1 // pred_check_branch
      %135 = sbr.rel (0) target = $region37
    $region36: #{tpu_custom_call.1} parent=1 // pred_region
      %136 = dma.done [#allocation9], 128
    $region37: #{tpu_custom_call.1} parent=1 // pred_fallthru
      _
    %137 = vsyncpa [#allocation3], 1
    %138 = vsyncpa [#allocation6], 1
    %139 = vsyncpa [#allocation4], 1
    %140 = vsyncpa [#allocation9], 1

</llo_original>
